<compile_context>
chip_gen: v6e
topology: v6e:2x2x1
jax: 0.10.0
libtpu: 0.0.40
codegen_flags: <defaults>
</compile_context>

<pallas_src>
import jax
import jax.numpy as jnp
from jax.experimental import pallas as pl
from jax.experimental.pallas import tpu as pltpu


def _copy_kernel(x_ref, o_ref):
    o_ref[...] = x_ref[...]


def _tiled_copy(arr2d, *, target_tile_bytes=4 * 1024 * 1024):
    """Stream-copy a lane-dense 2D array (last dim a multiple of 128)."""
    rows, width = arr2d.shape
    itemsize = jnp.dtype(arr2d.dtype).itemsize
    sublane_pack = max(8, 32 // itemsize)  # 8 for f32, 16 for bf16, 32 for int8/fp8

    # Lane tile: take the full width when a sublane_pack-high stripe fits the
    # per-buffer budget, otherwise the largest multiple of 128 that does.
    if width <= 128 or width * sublane_pack * itemsize <= target_tile_bytes:
        tile_cols = width
    else:
        tile_cols = (target_tile_bytes // (sublane_pack * itemsize)) // 128 * 128
        tile_cols = int(min(max(128, tile_cols), width))

    # Row tile: dtype-aware sublane rounding; full extent if rows are few.
    if rows <= sublane_pack:
        tile_rows = rows
    else:
        target_rows = max(sublane_pack, target_tile_bytes // (tile_cols * itemsize))
        tile_rows = int(min(rows, target_rows))
        tile_rows = max(sublane_pack, (tile_rows // sublane_pack) * sublane_pack)

    grid = (pl.cdiv(rows, tile_rows), pl.cdiv(width, tile_cols))

    return pl.pallas_call(
        _copy_kernel,
        out_shape=jax.ShapeDtypeStruct((rows, width), arr2d.dtype),
        grid_spec=pltpu.PrefetchScalarGridSpec(
            num_scalar_prefetch=0,
            grid=grid,
            in_specs=[pl.BlockSpec((tile_rows, tile_cols), lambda i, j: (i, j))],
            out_specs=pl.BlockSpec((tile_rows, tile_cols), lambda i, j: (i, j)),
        ),
        compiler_params=pltpu.CompilerParams(
            dimension_semantics=("parallel", "parallel"),
            vmem_limit_bytes=32 * 1024 * 1024,
        ),
    )(arr2d)


def fc_view(x):
    """Pallas equivalent of `x.view(nB, -1)`."""
    nB = x.shape[0]
    n = x.size
    D = n // nB if nB else 0
    out_shape_2d = (nB, D)

    # Unaligned (or degenerate) sizes: a reshape moves no data, so the pure
    # jnp path is already optimal and exactly matches the module semantics.
    if n == 0 or n % 128 != 0:
        return jnp.reshape(x, out_shape_2d)

    # Contiguous reshapes below are metadata-only (no HBM traffic).
    if D % 128 == 0:
        # Output shape is itself lane-dense: copy directly into (nB, D).
        return _tiled_copy(jnp.reshape(x, out_shape_2d))

    # Otherwise use the widest lane-dense slab that divides n, then reshape.
    flat = jnp.reshape(x, (n,))
    W = 128
    for cand in (4096, 2048, 1024, 512, 256):
        if n % cand == 0:
            W = cand
            break
    out_slab = _tiled_copy(flat.reshape(n // W, W))
    return out_slab.reshape(out_shape_2d)


if __name__ == "__main__":
    key = jax.random.PRNGKey(0)
    k1, k2, k3, k4 = jax.random.split(key, 4)

    ok = True

    # Main case: NCHW activation, aligned (n = 2*4*16*16 = 2048, D = 1024).
    x = jax.random.normal(k1, (2, 4, 16, 16), dtype=jnp.float32)
    out = jax.block_until_ready(fc_view(x))
    ref = jnp.reshape(x, (x.shape[0], -1))
    ok &= out.shape == ref.shape and bool(jnp.array_equal(out, ref))

    # bf16, aligned (exercises dtype-aware sublane rounding).
    xb = jax.random.normal(k2, (2, 4, 16, 16), dtype=jnp.float32).astype(jnp.bfloat16)
    outb = jax.block_until_ready(fc_view(xb))
    refb = jnp.reshape(xb, (xb.shape[0], -1))
    ok &= outb.shape == refb.shape and bool(jnp.array_equal(outb, refb))

    # Larger batch, aligned (rows > sublane pack, still tiny shapes).
    xl = jax.random.normal(k3, (16, 4, 16, 16), dtype=jnp.float32)
    outl = jax.block_until_ready(fc_view(xl))
    refl = jnp.reshape(xl, (xl.shape[0], -1))
    ok &= outl.shape == refl.shape and bool(jnp.array_equal(outl, refl))

    # Unaligned total size (n = 150): exercises the zero-copy fallback path.
    xu = jax.random.normal(k4, (2, 3, 5, 5), dtype=jnp.float32)
    outu = jax.block_until_ready(fc_view(xu))
    refu = jnp.reshape(xu, (xu.shape[0], -1))
    ok &= outu.shape == refu.shape and bool(jnp.array_equal(outu, refu))

    if ok:
        print("KERNEL_OK")
</pallas_src>

<mosaic_0001>
module attributes {stable_mosaic.version = 11 : i64} {
  func.func @_copy_kernel(%arg0: i32, %arg1: i32, %arg2: memref<2x1024xf32, #tpu.memory_space<vmem>>, %arg3: memref<2x1024xf32, #tpu.memory_space<vmem>>) attributes {dimension_semantics = [#tpu.dimension_semantics<parallel>, #tpu.dimension_semantics<parallel>], iteration_bounds = array<i64: 1, 1>, scalar_prefetch = 0 : i64, scratch_operands = 0 : i64, tpu.core_type = #tpu.core_type<tc>, window_params = [{transform_indices = @transform_0, window_bounds = array<i64: 2, 1024>}, {transform_indices = @transform_1, window_bounds = array<i64: 2, 1024>}]} {
    %c0 = arith.constant 0 : index
    %c0_0 = arith.constant 0 : index
    %0 = vector.load %arg2[%c0, %c0_0] : memref<2x1024xf32, #tpu.memory_space<vmem>>, vector<2x1024xf32>
    %c0_1 = arith.constant 0 : index
    %c0_2 = arith.constant 0 : index
    %1 = vector.load %arg3[%c0_1, %c0_2] : memref<2x1024xf32, #tpu.memory_space<vmem>>, vector<2x1024xf32>
    tpu.vector_store %arg3[%c0_1, %c0_2], %0 {strides = array<i32>} : memref<2x1024xf32, #tpu.memory_space<vmem>>, vector<2x1024xf32>,
    return
  }
  func.func @transform_0(%arg0: i32, %arg1: i32) -> (i32, i32) {
    %c0_i32 = arith.constant 0 : i32
    return %arg0, %arg1 : i32, i32
  }
  func.func @transform_1(%arg0: i32, %arg1: i32) -> (i32, i32) {
    %c0_i32 = arith.constant 0 : i32
    return %arg0, %arg1 : i32, i32
  }
}

</mosaic_0001>

<llo_original>
// kernel: tpu_custom_call.1
$region0: #{tpu_custom_call.1}
  #allocation0 [shape = 'u32[]', space=smem, size = 0x4, offset = 0x4, fixed_abs, tag = 'smem constant byte address 0x4 - core index']
  #allocation1 [shape = 'u32[144,128]{1,0:T(1,128)}', space=vmem, size = 0x12000, scoped, tag = 'internal scratch']
  %s0 = inlined_call_operand.hbm [shape: f32[2,1024], index: 0, kind: input, shape index: {}]
  %s1 = inlined_call_operand.hbm [shape: f32[2,1024], index: 1, kind: output, shape index: {}]
  %s2 = sld [smem:[#allocation0]]
  $region18: #{tpu_custom_call.1} parent=0
    _
  %s4 = ssub.s32 1, %s2
  %s5 = scalar_select 0, %s4, %s2
  $region1: #{tpu_custom_call.1} parent=0
    #allocation2 [shape = 'u8[8192]{0}', space=vmem, size = 0x2000, scoped, tag = 'input window, operand 0, single buffered']
    #allocation3 [shape = 's32[1]{0}', space=sflag, size = 0x4, scoped, tag = 'scoped memory for tpu_custom_call.1']
    #allocation4 [shape = 's32[1]{0}', space=sflag, size = 0x4, scoped, tag = 'scoped memory for tpu_custom_call.1']
    #allocation5 [shape = 'u8[8192]{0}', space=vmem, size = 0x2000, scoped, tag = 'output window, operand 0, single buffered']
    %6 = vsyncpa [#allocation3], 0
    %7 = vsyncpa [#allocation4], 0
    // Predicated region
    $region2: #{tpu_custom_call.1} parent=1 // pred_check
      _
    $region3: #{tpu_custom_call.1} parent=1 // pred_check_branch
      %9 = sbr.rel (0) target = $region5
    $region4: #{tpu_custom_call.1} parent=1 // pred_region
      %s11 = ssub.s32 256, 256
      %12 = vsyncadd [#allocation3], %s11
      %s14 = sshll.u32 [#allocation2], 4
      %s15 = int_to_ptr.vmem [resolvable:$true] %s14
      %17 = dma.hbm_to_vmem [thread:$0]  %s0, 256, %s15, [#allocation3]
    $region5: #{tpu_custom_call.1} parent=1 // pred_fallthru
      _
    // Predicated region
    $region6: #{tpu_custom_call.1} parent=1 // pred_check
      _
    $region7: #{tpu_custom_call.1} parent=1 // pred_check_branch
      %19 = sbr.rel (0) target = $region9
    $region8: #{tpu_custom_call.1} parent=1 // pred_region
      %20 = dma.done [#allocation3], 256
    $region9: #{tpu_custom_call.1} parent=1 // pred_fallthru
      _
    %v21 = vld [vmem:[#allocation2] sm:$0xff]
    %v22 = vld [vmem:[#allocation2 + $0x8] sm:$0xff]
    %23 = vst [vmem:[#allocation5] sm:$0xff] %v21
    %24 = vst [vmem:[#allocation5 + $0x8] sm:$0xff] %v22
    // Predicated region
    $region10: #{tpu_custom_call.1} parent=1 // pred_check
      _
    $region11: #{tpu_custom_call.1} parent=1 // pred_check_branch
      %26 = sbr.rel (0) target = $region13
    $region12: #{tpu_custom_call.1} parent=1 // pred_region
      %s28 = ssub.s32 256, 256
      %29 = vsyncadd [#allocation4], %s28
      %s31 = sshll.u32 [#allocation5], 4
      %s32 = int_to_ptr.vmem [resolvable:$true] %s31
      %34 = dma.vmem_to_hbm [thread:$0]  %s32, 256, %s1, [#allocation4]
    $region13: #{tpu_custom_call.1} parent=1 // pred_fallthru
      _
    // Predicated region
    $region14: #{tpu_custom_call.1} parent=1 // pred_check
      _
    $region15: #{tpu_custom_call.1} parent=1 // pred_check_branch
      %36 = sbr.rel (0) target = $region17
    $region16: #{tpu_custom_call.1} parent=1 // pred_region
      %37 = dma.done [#allocation4], 256
    $region17: #{tpu_custom_call.1} parent=1 // pred_fallthru
      _
    %38 = vsyncpa [#allocation3], 1
    %39 = vsyncpa [#allocation4], 1

</llo_original>
